<compile_context>
chip_gen: v5e
topology: v5e:2x2
jax: 0.10.0
libtpu: 0.0.40
codegen_flags: <defaults>
</compile_context>

<pallas_src>
import math

import jax
import jax.numpy as jnp
from jax.experimental import pallas as pl
from jax.experimental.pallas import tpu as pltpu


def word_encoder_kernel(q_ref, len_ref, w_ref, o_ref):
    """One batch tile: scaled one-hot bag (VPU) -> single MXU matmul -> lane-dense store.

    q_ref:   (TB, T)  int32 token ids
    len_ref: (TB, 1)  int32 valid lengths
    w_ref:   (V, Dp)  f32 embedding table (embed axis zero-padded to a lane multiple)
    o_ref:   (TB, Dp) f32 output block
    """
    TB, T = q_ref.shape
    V, _ = w_ref.shape

    q = q_ref[...]                                                   # (TB, T)

    # Mask (t < len_b) folded together with the 1/T scale of torch.mean(dim=1)
    # (mean over query_max positions; masked positions contribute zeros).
    pos = jax.lax.broadcasted_iota(jnp.int32, (TB, T), 1)
    keep = jnp.where(pos < len_ref[...], 1.0 / T, 0.0)               # (TB, T) f32

    # Scaled one-hot "bag": bag[b, v] = (1/T) * #{ t < len_b : q[b, t] == v }.
    vocab = jax.lax.broadcasted_iota(jnp.int32, (TB, T, V), 2)
    hit = vocab == q[:, :, None]                                     # (TB, T, V)
    bag = jnp.sum(jnp.where(hit, keep[:, :, None], 0.0), axis=1)     # (TB, V)

    # Single MXU matmul falls straight into the lane-dense output block.
    o_ref[...] = jnp.dot(bag, w_ref[...],
                         preferred_element_type=jnp.float32).astype(o_ref.dtype)

    # TODO(synk): nn.Dropout(p=0.2) is identity at inference; training-mode dropout
    # (pltpu.prng_seed + pltpu.prng_random_bits mask) is not implemented here.
    # TODO(synk): for realistic vocab sizes (V >~ 1e3) replace the one-hot bag with a
    # scalar-prefetch / DMA row gather (weight left in HBM via memory_space=pl.ANY) so
    # work and VMEM scale as O(B*T*D) instead of O(B*T*V) (required on v7x 64 MiB VMEM).


def _round_up(x, m):
    return ((x + m - 1) // m) * m


def word_encoder(queries, query_lens, embed_weight, *, batch_tile=None):
    """Pallas wrapper matching WordEncoder.forward (inference) semantics.

    queries:      (B, T) integer token ids
    query_lens:   (B,)   integer valid lengths
    embed_weight: (V, D) float32 embedding table
    returns:      squeeze((B, D)) float32
    """
    queries = jnp.asarray(queries, jnp.int32)
    query_lens = jnp.asarray(query_lens, jnp.int32).reshape(-1)
    embed_weight = jnp.asarray(embed_weight, jnp.float32)

    B, T = queries.shape
    V, D = embed_weight.shape

    # Lane-dense output: pad the embed axis up to a multiple of 128.
    Dp = _round_up(D, 128)
    # Sublane-aligned batch tiles; one grid step per tile ("parallel" -> 2 TCs on v7x).
    if batch_tile is None:
        batch_tile = min(128, _round_up(B, 8))
    TB = _round_up(batch_tile, 8)
    Bp = _round_up(B, TB)

    q = queries
    if Bp != B:
        q = jnp.zeros((Bp, T), jnp.int32).at[:B].set(q)
    lens2d = jnp.zeros((Bp, 1), jnp.int32).at[:B, 0].set(query_lens)
    w = embed_weight
    if Dp != D:
        w = jnp.zeros((V, Dp), jnp.float32).at[:, :D].set(w)

    out = pl.pallas_call(
        word_encoder_kernel,
        out_shape=jax.ShapeDtypeStruct((Bp, Dp), jnp.float32),
        grid_spec=pltpu.PrefetchScalarGridSpec(
            num_scalar_prefetch=0,
            grid=(Bp // TB,),
            in_specs=[
                pl.BlockSpec((TB, T), lambda i: (i, 0)),    # queries tile
                pl.BlockSpec((TB, 1), lambda i: (i, 0)),    # lengths tile
                pl.BlockSpec((V, Dp), lambda i: (0, 0)),    # table resident across grid
            ],
            out_specs=pl.BlockSpec((TB, Dp), lambda i: (i, 0)),
        ),
        compiler_params=pltpu.CompilerParams(
            dimension_semantics=("parallel",)),
    )(q, lens2d, w)

    out = out[:B, :D]
    # torch.squeeze: drop size-1 dims (no-op for B > 1 and D > 1).
    return jnp.squeeze(out)


def _reference(queries, query_lens, embed_weight):
    """Pure-JAX reference of the PyTorch forward (inference)."""
    B, T = queries.shape
    emb = embed_weight[queries]                                     # (B, T, D)
    mask = (jnp.arange(T)[None, :] < query_lens[:, None]).astype(emb.dtype)
    emb = emb * mask[:, :, None]
    return jnp.squeeze(jnp.mean(emb, axis=1))


if __name__ == "__main__":
    key = jax.random.PRNGKey(0)
    kq, kw = jax.random.split(key)

    # Small shapes consistent with the module: num_word=32, embed_dim=32,
    # batch=2, query_max_len=8.
    B, T, V, D = 2, 8, 32, 32

    queries = jax.random.randint(kq, (B, T), 0, V, dtype=jnp.int32)
    query_lens = jnp.array([5, 8], dtype=jnp.int32)

    # Deterministic kaiming_uniform_-style init: bound = sqrt(6 / fan_in), fan_in = embed_dim.
    bound = math.sqrt(6.0 / D)
    embed_weight = jax.random.uniform(kw, (V, D), jnp.float32, -bound, bound)

    out = word_encoder(queries, query_lens, embed_weight)
    out = jax.block_until_ready(out)

    ref = _reference(queries, query_lens, embed_weight)
    assert out.shape == (B, D), out.shape
    assert jnp.allclose(out, ref, atol=1e-5, rtol=1e-5)

    print("KERNEL_OK")
</pallas_src>

<mosaic_0001>
module attributes {stable_mosaic.version = 11 : i64} {
  func.func @word_encoder_kernel(%arg0: i32, %arg1: memref<8x8xi32, #tpu.memory_space<vmem>>, %arg2: memref<8x1xi32, #tpu.memory_space<vmem>>, %arg3: memref<32x128xf32, #tpu.memory_space<vmem>>, %arg4: memref<8x128xf32, #tpu.memory_space<vmem>>) attributes {dimension_semantics = [#tpu.dimension_semantics<parallel>], iteration_bounds = array<i64: 1>, scalar_prefetch = 0 : i64, scratch_operands = 0 : i64, tpu.core_type = #tpu.core_type<tc>, window_params = [{transform_indices = @transform_0, window_bounds = array<i64: 8, 8>}, {transform_indices = @transform_1, window_bounds = array<i64: 8, 1>}, {pipeline_mode = #tpu.pipeline_mode<synchronous>, transform_indices = @transform_2, window_bounds = array<i64: 32, 128>}, {transform_indices = @transform_3, window_bounds = array<i64: 8, 128>}]} {
    %c0 = arith.constant 0 : index
    %c0_0 = arith.constant 0 : index
    %0 = vector.load %arg1[%c0, %c0_0] : memref<8x8xi32, #tpu.memory_space<vmem>>, vector<8x8xi32>
    %1 = tpu.iota {dimensions = array<i32: 1>} : vector<8x8xi32>
    %c0_1 = arith.constant 0 : index
    %c0_2 = arith.constant 0 : index
    %2 = vector.load %arg2[%c0_1, %c0_2] : memref<8x1xi32, #tpu.memory_space<vmem>>, vector<8x1xi32>
    %3 = vector.broadcast %2 : vector<8x1xi32> to vector<8x8xi32>
    %4 = arith.cmpi slt, %1, %3 : vector<8x8xi32>
    %cst = arith.constant 1.250000e-01 : f32
    %cst_3 = arith.constant 0.000000e+00 : f32
    %5 = vector.broadcast %cst : f32 to vector<8x8xf32>
    %6 = vector.broadcast %cst_3 : f32 to vector<8x8xf32>
    %7 = arith.select %4, %5, %6 : vector<8x8xi1>, vector<8x8xf32>
    %8 = tpu.iota {dimensions = array<i32: 2>} : vector<8x8x32xi32>
    %9 = vector.shape_cast %0 : vector<8x8xi32> to vector<8x8x1xi32>
    %10 = vector.broadcast %9 : vector<8x8x1xi32> to vector<8x8x32xi32>
    %11 = arith.cmpi eq, %8, %10 : vector<8x8x32xi32>
    %12 = vector.shape_cast %7 : vector<8x8xf32> to vector<8x8x1xf32>
    %cst_4 = arith.constant 0.000000e+00 : f32
    %13 = vector.shape_cast %12 : vector<8x8x1xf32> to vector<8x8x1xf32>
    %14 = vector.broadcast %13 : vector<8x8x1xf32> to vector<8x8x32xf32>
    %15 = vector.broadcast %cst_4 : f32 to vector<8x8x32xf32>
    %16 = arith.select %11, %14, %15 : vector<8x8x32xi1>, vector<8x8x32xf32>
    %cst_5 = arith.constant dense<0.000000e+00> : vector<8x32xf32>
    %17 = vector.multi_reduction <add>, %16, %cst_5 [1] : vector<8x8x32xf32> to vector<8x32xf32>
    %c0_6 = arith.constant 0 : index
    %c0_7 = arith.constant 0 : index
    %18 = vector.load %arg3[%c0_6, %c0_7] : memref<32x128xf32, #tpu.memory_space<vmem>>, vector<32x128xf32>
    %cst_8 = arith.constant dense<0.000000e+00> : vector<8x128xf32>
    %19 = tpu.matmul %17, %18, %cst_8 {dimension_numbers = #tpu.dot_dimension_numbers<[1], [0], [0], [1], [0, 0, 1, 1], [], []>} : vector<8x32xf32>, vector<32x128xf32>, vector<8x128xf32> -> vector<8x128xf32>
    %c0_9 = arith.constant 0 : index
    %c0_10 = arith.constant 0 : index
    %20 = vector.load %arg4[%c0_9, %c0_10] : memref<8x128xf32, #tpu.memory_space<vmem>>, vector<8x128xf32>
    tpu.vector_store %arg4[%c0_9, %c0_10], %19 {strides = array<i32>} : memref<8x128xf32, #tpu.memory_space<vmem>>, vector<8x128xf32>,
    return
  }
  func.func @transform_0(%arg0: i32) -> (i32, i32) {
    %c0_i32 = arith.constant 0 : i32
    %c0_i32_0 = arith.constant 0 : i32
    return %arg0, %c0_i32 : i32, i32
  }
  func.func @transform_1(%arg0: i32) -> (i32, i32) {
    %c0_i32 = arith.constant 0 : i32
    %c0_i32_0 = arith.constant 0 : i32
    return %arg0, %c0_i32 : i32, i32
  }
  func.func @transform_2(%arg0: i32) -> (i32, i32) {
    %c0_i32 = arith.constant 0 : i32
    %c0_i32_0 = arith.constant 0 : i32
    %c0_i32_1 = arith.constant 0 : i32
    return %c0_i32, %c0_i32_0 : i32, i32
  }
  func.func @transform_3(%arg0: i32) -> (i32, i32) {
    %c0_i32 = arith.constant 0 : i32
    %c0_i32_0 = arith.constant 0 : i32
    return %arg0, %c0_i32 : i32, i32
  }
}

</mosaic_0001>

<llo_original>
// kernel: tpu_custom_call.1
$region0: #{tpu_custom_call.1}
  #allocation0 [shape = 'u32[]', space=smem, size = 0x4, offset = 0x4, fixed_abs, tag = 'smem constant byte address 0x4 - core index']
  #allocation1 [shape = 'u32[72,128]{1,0:T(1,128)}', space=vmem, size = 0x9000, scoped, tag = 'internal scratch']
  %s0 = inlined_call_operand.vmem [shape: s32[8,8], index: 0, kind: input, shape index: {}]
  %s1 = inlined_call_operand.vmem [shape: s32[8,1], index: 1, kind: input, shape index: {}]
  %s2 = inlined_call_operand.hbm [shape: f32[32,128], index: 2, kind: input, shape index: {}]
  %s3 = inlined_call_operand.hbm [shape: f32[8,128], index: 3, kind: output, shape index: {}]
  %s4 = sld [smem:[#allocation0]]
  $region26: #{tpu_custom_call.1} parent=0
    _
  %s6 = ssub.s32 1, %s4
  %s7 = scalar_select 0, %s6, %s4
  $region1: #{tpu_custom_call.1} parent=0
    #allocation2 [shape = 'u8[16384]{0}', space=vmem, size = 0x4000, scoped, tag = 'input window, operand 2, single buffered']
    #allocation3 [shape = 's32[1]{0}', space=sflag, size = 0x4, scoped, tag = 'scoped memory for tpu_custom_call.1']
    #allocation4 [shape = 's32[1]{0}', space=sflag, size = 0x4, scoped, tag = 'scoped memory for tpu_custom_call.1']
    #allocation5 [shape = 'u8[4096]{0}', space=vmem, size = 0x1000, scoped, tag = 'output window, operand 0, single buffered']
    %8 = vsyncpa [#allocation3], 0
    %9 = vsyncpa [#allocation4], 0
    // Predicated region
    $region2: #{tpu_custom_call.1} parent=1 // pred_check
      _
    $region3: #{tpu_custom_call.1} parent=1 // pred_check_branch
      %11 = sbr.rel (0) target = $region5
    $region4: #{tpu_custom_call.1} parent=1 // pred_region
      _
    $region5: #{tpu_custom_call.1} parent=1 // pred_fallthru
      _
    // Predicated region
    $region6: #{tpu_custom_call.1} parent=1 // pred_check
      _
    $region7: #{tpu_custom_call.1} parent=1 // pred_check_branch
      %13 = sbr.rel (0) target = $region9
    $region8: #{tpu_custom_call.1} parent=1 // pred_region
      _
    $region9: #{tpu_custom_call.1} parent=1 // pred_fallthru
      _
    // Predicated region
    $region10: #{tpu_custom_call.1} parent=1 // pred_check
      _
    $region11: #{tpu_custom_call.1} parent=1 // pred_check_branch
      %15 = sbr.rel (0) target = $region13
    $region12: #{tpu_custom_call.1} parent=1 // pred_region
      %17 = vsyncadd [#allocation3], 0
      %s18 = sshll.u32 %s2, 4
      %s19 = int_to_ptr.hbm [resolvable:$true] %s18
      %s20 = sshll.u32 [#allocation2], 4
      %s21 = int_to_ptr.vmem [resolvable:$true] %s20
      %26 = dma.hbm_to_vmem [thread:$0]  %s19, 512, %s21, [#allocation3], 128, 128, 8
    $region13: #{tpu_custom_call.1} parent=1 // pred_fallthru
      _
    // Predicated region
    $region14: #{tpu_custom_call.1} parent=1 // pred_check
      _
    $region15: #{tpu_custom_call.1} parent=1 // pred_check_branch
      %28 = sbr.rel (0) target = $region17
    $region16: #{tpu_custom_call.1} parent=1 // pred_region
      %30 = dma.done [#allocation3], 512
    $region17: #{tpu_custom_call.1} parent=1 // pred_fallthru
      _
    %v31 = vld [vmem:[%s0] sm:$0xff]
    %v32 = vlaneseq
    %v33 = vand.u32 %v32, 127
    %v34 = vld [vmem:[%s1] sm:$0xff]
    %35 = vset.pattern.permute.xlu0 0
    %36 = vperm.xlu0 %35, %v34
    %v37 = vpop.permute.xlu0 %36
    %vm38 = vcmp.lt.s32.totalorder %v33, %v37
    %v39 = vsel %vm38, 0.125, 0.0
    %v40 = vperm.slane %v31, 0
    %v41 = vlaneseq
    %v42 = vshrl.u32 %v41, 7
    %44 = vset.pattern.permute.xlu0 %v42
    %45 = vperm.xlu0 %44, %v40
    %v46 = vpop.permute.xlu0 %45
    %v47 = vperm.slane %v31, 1
    %v48 = vlaneseq
    %v49 = vshrl.u32 %v48, 7
    %51 = vset.pattern.permute.xlu0 %v49
    %52 = vperm.xlu0 %51, %v47
    %v53 = vpop.permute.xlu0 %52
    %v54 = vperm.slane %v31, 2
    %v55 = vlaneseq
    %v56 = vshrl.u32 %v55, 7
    %58 = vset.pattern.permute.xlu0 %v56
    %59 = vperm.xlu0 %58, %v54
    %v60 = vpop.permute.xlu0 %59
    %v61 = vperm.slane %v31, 3
    %v62 = vlaneseq
    %v63 = vshrl.u32 %v62, 7
    %65 = vset.pattern.permute.xlu0 %v63
    %66 = vperm.xlu0 %65, %v61
    %v67 = vpop.permute.xlu0 %66
    %v68 = vperm.slane %v31, 4
    %v69 = vlaneseq
    %v70 = vshrl.u32 %v69, 7
    %72 = vset.pattern.permute.xlu0 %v70
    %73 = vperm.xlu0 %72, %v68
    %v74 = vpop.permute.xlu0 %73
    %v75 = vperm.slane %v31, 5
    %v76 = vlaneseq
    %v77 = vshrl.u32 %v76, 7
    %79 = vset.pattern.permute.xlu0 %v77
    %80 = vperm.xlu0 %79, %v75
    %v81 = vpop.permute.xlu0 %80
    %v82 = vperm.slane %v31, 6
    %v83 = vlaneseq
    %v84 = vshrl.u32 %v83, 7
    %86 = vset.pattern.permute.xlu0 %v84
    %87 = vperm.xlu0 %86, %v82
    %v88 = vpop.permute.xlu0 %87
    %v89 = vperm.slane %v31, 7
    %v90 = vlaneseq
    %v91 = vshrl.u32 %v90, 7
    %93 = vset.pattern.permute.xlu0 %v91
    %94 = vperm.xlu0 %93, %v89
    %v95 = vpop.permute.xlu0 %94
    %vm96 = vcmp.eq.s32.totalorder %v33, %v46
    %vm97 = vcmp.eq.s32.totalorder %v33, %v53
    %vm98 = vcmp.eq.s32.totalorder %v33, %v60
    %vm99 = vcmp.eq.s32.totalorder %v33, %v67
    %vm100 = vcmp.eq.s32.totalorder %v33, %v74
    %vm101 = vcmp.eq.s32.totalorder %v33, %v81
    %vm102 = vcmp.eq.s32.totalorder %v33, %v88
    %vm103 = vcmp.eq.s32.totalorder %v33, %v95
    %v104 = vperm.slane %v39, 0
    %v105 = vlaneseq
    %v106 = vshrl.u32 %v105, 7
    %108 = vset.pattern.permute.xlu0 %v106
    %109 = vperm.xlu0 %108, %v104
    %v110 = vpop.permute.xlu0 %109
    %v111 = vperm.slane %v39, 1
    %v112 = vlaneseq
    %v113 = vshrl.u32 %v112, 7
    %115 = vset.pattern.permute.xlu0 %v113
    %116 = vperm.xlu0 %115, %v111
    %v117 = vpop.permute.xlu0 %116
    %v118 = vperm.slane %v39, 2
    %v119 = vlaneseq
    %v120 = vshrl.u32 %v119, 7
    %122 = vset.pattern.permute.xlu0 %v120
    %123 = vperm.xlu0 %122, %v118
    %v124 = vpop.permute.xlu0 %123
    %v125 = vperm.slane %v39, 3
    %v126 = vlaneseq
    %v127 = vshrl.u32 %v126, 7
    %129 = vset.pattern.permute.xlu0 %v127
    %130 = vperm.xlu0 %129, %v125
    %v131 = vpop.permute.xlu0 %130
    %v132 = vperm.slane %v39, 4
    %v133 = vlaneseq
    %v134 = vshrl.u32 %v133, 7
    %136 = vset.pattern.permute.xlu0 %v134
    %137 = vperm.xlu0 %136, %v132
    %v138 = vpop.permute.xlu0 %137
    %v139 = vperm.slane %v39, 5
    %v140 = vlaneseq
    %v141 = vshrl.u32 %v140, 7
    %143 = vset.pattern.permute.xlu0 %v141
    %144 = vperm.xlu0 %143, %v139
    %v145 = vpop.permute.xlu0 %144
    %v146 = vperm.slane %v39, 6
    %v147 = vlaneseq
    %v148 = vshrl.u32 %v147, 7
    %150 = vset.pattern.permute.xlu0 %v148
    %151 = vperm.xlu0 %150, %v146
    %v152 = vpop.permute.xlu0 %151
    %v153 = vperm.slane %v39, 7
    %v154 = vlaneseq
    %v155 = vshrl.u32 %v154, 7
    %157 = vset.pattern.permute.xlu0 %v155
    %158 = vperm.xlu0 %157, %v153
    %v159 = vpop.permute.xlu0 %158
    %v160 = vsel %vm96, %v110, 0.0
    %v161 = vsel %vm97, %v117, 0.0
    %v162 = vsel %vm98, %v124, 0.0
    %v163 = vsel %vm99, %v131, 0.0
    %v164 = vsel %vm100, %v138, 0.0
    %v165 = vsel %vm101, %v145, 0.0
    %v166 = vsel %vm102, %v152, 0.0
    %v167 = vsel %vm103, %v159, 0.0
    %vm168 = vcmask 261120
    %v169 = vsel %vm168, %v160, 0.0
    %v170 = vrot.slane %v169, 4
    %v171 = vadd.f32 %v169, %v170
    %v172 = vrot.slane %v171, 2
    %v173 = vadd.f32 %v171, %v172
    %v174 = vrot.slane %v173, 1
    %v175 = vadd.f32 %v173, %v174
    %v176 = vsel %vm168, %v161, 0.0
    %v177 = vrot.slane %v176, 4
    %v178 = vadd.f32 %v176, %v177
    %v179 = vrot.slane %v178, 2
    %v180 = vadd.f32 %v178, %v179
    %v181 = vrot.slane %v180, 1
    %v182 = vadd.f32 %v180, %v181
    %v183 = vsel %vm168, %v162, 0.0
    %v184 = vrot.slane %v183, 4
    %v185 = vadd.f32 %v183, %v184
    %v186 = vrot.slane %v185, 2
    %v187 = vadd.f32 %v185, %v186
    %v188 = vrot.slane %v187, 1
    %v189 = vadd.f32 %v187, %v188
    %v190 = vsel %vm168, %v163, 0.0
    %v191 = vrot.slane %v190, 4
    %v192 = vadd.f32 %v190, %v191
    %v193 = vrot.slane %v192, 2
    %v194 = vadd.f32 %v192, %v193
    %v195 = vrot.slane %v194, 1
    %v196 = vadd.f32 %v194, %v195
    %v197 = vsel %vm168, %v164, 0.0
    %v198 = vrot.slane %v197, 4
    %v199 = vadd.f32 %v197, %v198
    %v200 = vrot.slane %v199, 2
    %v201 = vadd.f32 %v199, %v200
    %v202 = vrot.slane %v201, 1
    %v203 = vadd.f32 %v201, %v202
    %v204 = vsel %vm168, %v165, 0.0
    %v205 = vrot.slane %v204, 4
    %v206 = vadd.f32 %v204, %v205
    %v207 = vrot.slane %v206, 2
    %v208 = vadd.f32 %v206, %v207
    %v209 = vrot.slane %v208, 1
    %v210 = vadd.f32 %v208, %v209
    %v211 = vsel %vm168, %v166, 0.0
    %v212 = vrot.slane %v211, 4
    %v213 = vadd.f32 %v211, %v212
    %v214 = vrot.slane %v213, 2
    %v215 = vadd.f32 %v213, %v214
    %v216 = vrot.slane %v215, 1
    %v217 = vadd.f32 %v215, %v216
    %v218 = vsel %vm168, %v167, 0.0
    %v219 = vrot.slane %v218, 4
    %v220 = vadd.f32 %v218, %v219
    %v221 = vrot.slane %v220, 2
    %v222 = vadd.f32 %v220, %v221
    %v223 = vrot.slane %v222, 1
    %v224 = vadd.f32 %v222, %v223
    %v225 = vld [vmem:[#allocation2] sm:$0xff]
    %v226 = vld [vmem:[#allocation2 + $0x8] sm:$0xff]
    %v227 = vld [vmem:[#allocation2 + $0x10] sm:$0xff]
    %v228 = vld [vmem:[#allocation2 + $0x18] sm:$0xff]
    %vm237 = vcmask 1041409
    %v238 = vsel %vm237, %v182, %v175
    %vm239 = vcmask 1042434
    %v240 = vsel %vm239, %v189, %v238
    %vm241 = vcmask 1043459
    %v242 = vsel %vm241, %v196, %v240
    %vm243 = vcmask 1044484
    %v244 = vsel %vm243, %v203, %v242
    %vm245 = vcmask 1045509
    %v246 = vsel %vm245, %v210, %v244
    %vm247 = vcmask 1046534
    %v248 = vsel %vm247, %v217, %v246
    %vm249 = vcmask 1047559
    %v250 = vsel %vm249, %v224, %v248
    %v251 = vsel %vm168, %v250, 0
    %253 = vmatpush.msra.mxu0 0.0
    %254 = vmatpush.msra.mxu0 0.0
    %255 = vmatpush.msra.mxu0 0.0
    %256 = vmatpush.msra.mxu0 0.0
    %257 = vmatpush.msra.mxu0 0.0
    %258 = vmatpush.msra.mxu0 0.0
    %259 = vmatpush.msra.mxu0 0.0
    %260 = vmatpush.msra.mxu0 0.0
    %261 = vmatpush.msra.mxu0 0.0
    %262 = vmatpush.msra.mxu0 0.0
    %263 = vmatpush.msra.mxu0 0.0
    %264 = vmatpush.msra.mxu0 0.0
    %265 = vmatpush.msra.mxu0 %v228
    %266 = vmatpush.msra.mxu0 %v227
    %267 = vmatpush.msra.mxu0 %v226
    %268 = vmatpush.msra.mxu0 %v225
    %269 = vmatmul.f32.gmra.mxu0 %v251
    %v270 = vpop.f32.mrf.mxu0
    %v271 = vadd.f32 0.0, %v270
    %272 = vdwg.mxu0
    %273 = vst [vmem:[#allocation5] sm:$0xff] %v271
    // Predicated region
    $region18: #{tpu_custom_call.1} parent=1 // pred_check
      _
    $region19: #{tpu_custom_call.1} parent=1 // pred_check_branch
      %275 = sbr.rel (0) target = $region21
    $region20: #{tpu_custom_call.1} parent=1 // pred_region
      %277 = vsyncadd [#allocation4], 0
      %s279 = sshll.u32 [#allocation5], 4
      %s280 = int_to_ptr.vmem [resolvable:$true] %s279
      %s281 = sshll.u32 %s3, 4
      %s282 = int_to_ptr.hbm [resolvable:$true] %s281
      %284 = dma.vmem_to_hbm [thread:$0]  %s280, 128, %s282, [#allocation4]
    $region21: #{tpu_custom_call.1} parent=1 // pred_fallthru
      _
    // Predicated region
    $region22: #{tpu_custom_call.1} parent=1 // pred_check
      _
    $region23: #{tpu_custom_call.1} parent=1 // pred_check_branch
      %286 = sbr.rel (0) target = $region25
    $region24: #{tpu_custom_call.1} parent=1 // pred_region
      %288 = dma.done [#allocation4], 128
    $region25: #{tpu_custom_call.1} parent=1 // pred_fallthru
      _
    %289 = vsyncpa [#allocation3], 1
    %290 = vsyncpa [#allocation4], 1

</llo_original>
